<compile_context>
chip_gen: v7x
topology: tpu7x:2x2x1
jax: 0.10.0
libtpu: 0.0.40
codegen_flags: <defaults>
</compile_context>

<pallas_src>
import math

import jax
import jax.numpy as jnp
from jax.experimental import pallas as pl
from jax.experimental.pallas import tpu as pltpu


def _round_up(x, m):
    return ((x + m - 1) // m) * m


# ---------------------------------------------------------------------------
# Kernels
# ---------------------------------------------------------------------------

def _cascade_kernel(x_ref, w_ref, b_ref, o_ref):
    """Full-K-resident path. x:[tm,F], w:[F,2Hp], b:[1,2Hp], o:[tm,Hp]."""
    hp = o_ref.shape[-1]
    x = x_ref[...].astype(w_ref.dtype)          # in-kernel cast: no wrapper astype
    y = jnp.dot(x, w_ref[...], preferred_element_type=jnp.float32) + b_ref[...]
    a = y[:, :hp]                               # 128-aligned static split
    g = y[:, hp:]
    o_ref[...] = (a * jax.nn.sigmoid(g)).astype(o_ref.dtype)


def _cascade_kernel_ksplit(x_ref, w_ref, b_ref, o_ref, acc_ref):
    """K-split path. grid=(M tiles, K tiles); acc is a persistent f32 scratch."""
    k = pl.program_id(1)
    part = jnp.dot(x_ref[...].astype(w_ref.dtype), w_ref[...],
                   preferred_element_type=jnp.float32)

    @pl.when(k == 0)
    def _():
        acc_ref[...] = part

    @pl.when(k > 0)
    def _():
        acc_ref[...] += part

    @pl.when(k == pl.num_programs(1) - 1)
    def _():
        hp = o_ref.shape[-1]
        y = acc_ref[...] + b_ref[...]
        o_ref[...] = (y[:, :hp] * jax.nn.sigmoid(y[:, hp:])).astype(o_ref.dtype)


# ---------------------------------------------------------------------------
# Parameter preparation (do once, reuse across forward calls)
# ---------------------------------------------------------------------------

def prepare_cascade_params(weight, bias, *, compute_dtype=jnp.bfloat16):
    """Transpose + fuse + lane-pad the nn.Linear params.

    weight: [F, F] (PyTorch nn.Linear layout: out_features, in_features)
    bias:   [F]
    Returns (w_fused [F, 2*Hp] in compute_dtype, b_fused [1, 2*Hp] f32, half).
    """
    f_out, f_in = weight.shape
    assert f_out == f_in, "cascade layer is square (num_features -> num_features)"
    assert f_out % 2 == 0, "GLU needs an even number of output features"
    half = f_out // 2
    assert half >= 128, "use cascade_layer() (XLA fallback) for tiny feature dims"
    hp = _round_up(half, 128)                       # lane-dense output half

    wdt = compute_dtype or weight.dtype
    wt = weight.T.astype(wdt)                       # [F_in, F_out]; x @ wt == x @ W.T
    w_fused = jnp.zeros((f_in, 2 * hp), wdt)
    w_fused = w_fused.at[:, :half].set(wt[:, :half])
    w_fused = w_fused.at[:, hp:hp + half].set(wt[:, half:])

    b_fused = jnp.zeros((1, 2 * hp), jnp.float32)   # bias added at f32
    b_fused = b_fused.at[0, :half].set(bias[:half].astype(jnp.float32))
    b_fused = b_fused.at[0, hp:hp + half].set(bias[half:].astype(jnp.float32))
    return w_fused, b_fused, half


# ---------------------------------------------------------------------------
# VMEM budgeting / tile planning
# ---------------------------------------------------------------------------

def _vmem_capacity_bytes():
    try:
        info = pltpu.get_tpu_info()
        cap = getattr(info, "vmem_capacity_bytes", None)
        if cap:
            return int(cap)
    except Exception:
        pass
    return 64 << 20        # v7x per-TC size: a safe assumption on every generation


def _plan_tiles(M, f_in, hp, x_itemsize, w_itemsize, out_itemsize, budget):
    """Return (tm, tk, ksplit, vmem_need_bytes)."""

    def need(tm, tk, w_bufs):
        return (2 * tm * f_in * x_itemsize          # x tiles (double buffered)
                + 2 * tm * hp * out_itemsize        # out tiles (double buffered)
                + w_bufs * tk * 2 * hp * w_itemsize # fused weight residency
                + 2 * 2 * hp * 4                    # bias
                + tm * 2 * hp * 4)                  # implicit f32 y / accumulator

    tm0 = max(8, min(512, _round_up(max(M, 1), 8)))

    # Preferred: whole fused weight resident, single-buffered (grid-invariant).
    if need(tm0, f_in, 1) <= budget:
        return tm0, f_in, False, need(tm0, f_in, 1)

    # K-split keeps the row tile fat when the weight alone blows the budget
    # (hits v7x's 64 MiB/TC first). Requires F % 128 == 0 so no garbage lanes
    # ever enter the contraction.
    if f_in % 128 == 0:
        tk = 512
        while tk > 128 and (f_in % tk != 0 or need(tm0, tk, 2) > budget):
            tk //= 2
        if f_in % tk == 0:
            tm = tm0
            while tm > 8 and need(tm, tk, 2) > budget:
                tm = _round_up(tm // 2, 8)
            return tm, tk, True, need(tm, tk, 2)

    # Last resort: shrink the row tile with the full weight resident.
    tm = tm0
    while tm > 8 and need(tm, f_in, 1) > budget:
        tm = _round_up(tm // 2, 8)
    return tm, f_in, False, need(tm, f_in, 1)


# ---------------------------------------------------------------------------
# Forward
# ---------------------------------------------------------------------------

def cascade_layer_prepared(x, w_fused, b_fused, half, *, tm=None, out_dtype=None):
    """Forward with pre-prepared (fused / padded / pre-cast) parameters."""
    f_in = x.shape[-1]
    assert w_fused.shape[0] == f_in
    hp = w_fused.shape[1] // 2
    lead = x.shape[:-1]
    M = int(math.prod(lead))
    out_dtype = out_dtype or x.dtype

    x2 = x.reshape(M, f_in)                      # leading-dim merge only (no copy)

    budget_cap = min((_vmem_capacity_bytes() * 3) // 4, 100 << 20)
    plan_budget = budget_cap - (2 << 20)         # headroom for Mosaic internal scratch
    tm_p, tk, ksplit, need = _plan_tiles(
        M, f_in, hp,
        jnp.dtype(x2.dtype).itemsize,
        jnp.dtype(w_fused.dtype).itemsize,
        jnp.dtype(out_dtype).itemsize,
        plan_budget)
    if tm is not None:
        tm_p = max(8, _round_up(min(tm, _round_up(M, 8)), 8))
    tm = tm_p

    grid_m = pl.cdiv(M, tm)                      # ragged M -> masked edge block
    vmem_limit = int(min(max(need + (4 << 20), 32 << 20), budget_cap))

    cost = pl.CostEstimate(
        flops=2 * M * f_in * 2 * hp,
        transcendentals=M * hp,
        bytes_accessed=int(x2.size * x2.dtype.itemsize
                           + w_fused.size * w_fused.dtype.itemsize
                           + b_fused.size * 4
                           + M * hp * jnp.dtype(out_dtype).itemsize),
    )

    def call(single_buffer_invariant):
        inv_kw = ({"pipeline_mode": pl.Buffered(1)}
                  if single_buffer_invariant else {})
        if not ksplit:
            grid = (grid_m,)
            in_specs = [
                pl.BlockSpec((tm, f_in), lambda i: (i, 0)),
                pl.BlockSpec((f_in, 2 * hp), lambda i: (0, 0), **inv_kw),
                pl.BlockSpec((1, 2 * hp), lambda i: (0, 0), **inv_kw),
            ]
            out_specs = pl.BlockSpec((tm, hp), lambda i: (i, 0))
            scratch = []
            kernel = _cascade_kernel
            sem = ("parallel",)
        else:
            grid = (grid_m, f_in // tk)
            in_specs = [
                pl.BlockSpec((tm, tk), lambda i, k: (i, k)),
                pl.BlockSpec((tk, 2 * hp), lambda i, k: (k, 0)),   # streamed
                pl.BlockSpec((1, 2 * hp), lambda i, k: (0, 0), **inv_kw),
            ]
            out_specs = pl.BlockSpec((tm, hp), lambda i, k: (i, 0))
            scratch = [pltpu.VMEM((tm, 2 * hp), jnp.float32)]
            kernel = _cascade_kernel_ksplit
            sem = ("parallel", "arbitrary")
        return pl.pallas_call(
            kernel,
            out_shape=jax.ShapeDtypeStruct((M, hp), out_dtype),
            grid_spec=pltpu.PrefetchScalarGridSpec(
                num_scalar_prefetch=0,
                grid=grid,
                in_specs=in_specs,
                out_specs=out_specs,
                scratch_shapes=scratch,
            ),
            compiler_params=pltpu.CompilerParams(
                dimension_semantics=sem,
                vmem_limit_bytes=vmem_limit,
            ),
            cost_estimate=cost,
        )(x2, w_fused, b_fused)

    try:
        out2 = call(single_buffer_invariant=True)
    except Exception:
        # Some JAX versions reject Buffered(1); fall back to default buffering.
        out2 = call(single_buffer_invariant=False)

    if hp != half:                                # only when half % 128 != 0
        out2 = out2[:, :half]
    return out2.reshape(*lead, half)


def cascade_layer(x, weight, bias, *, tm=None, compute_dtype=jnp.bfloat16,
                  out_dtype=None):
    """_CascadeLayer.forward(x) = GLU(Linear(x), dim=-1)."""
    half = weight.shape[0] // 2
    if half < 128:
        # Tiny feature dims (e.g. F=32): K starves the MXU and the Hp padding
        # inflates the output store 8x — plain XLA is both faster and exact.
        y = jnp.einsum("...i,oi->...o", x, weight) + bias
        return y[..., :half] * jax.nn.sigmoid(y[..., half:])
    w_fused, b_fused, half = prepare_cascade_params(
        weight, bias, compute_dtype=compute_dtype)
    return cascade_layer_prepared(x, w_fused, b_fused, half, tm=tm,
                                  out_dtype=out_dtype)


# ---------------------------------------------------------------------------
# Reference / init / demo
# ---------------------------------------------------------------------------

def init_params(key, num_features):
    # nn.init.xavier_uniform_ on weight [out, in]; bias = 0.
    bound = (6.0 / (2 * num_features)) ** 0.5
    weight = jax.random.uniform(
        key, (num_features, num_features), jnp.float32, -bound, bound)
    bias = jnp.zeros((num_features,), jnp.float32)
    return weight, bias


def _reference(x, weight, bias):
    y = jnp.einsum("...i,oi->...o", x, weight) + bias
    half = y.shape[-1] // 2
    return y[..., :half] * jax.nn.sigmoid(y[..., half:])


if __name__ == "__main__":
    key = jax.random.PRNGKey(0)
    kx0, kw0, kx1, kw1, kx2, kw2, kb = jax.random.split(key, 7)

    # 1) Module-typical tiny shape (batch=2, seq=8, F=32): XLA fallback path.
    B, T, F_ = 2, 8, 32
    x = jax.random.normal(kx0, (B, T, F_), jnp.float32)
    w, b = init_params(kw0, F_)
    out = jax.block_until_ready(cascade_layer(x, w, b))
    ref = _reference(x, w, b)
    assert out.shape == (B, T, F_ // 2)
    assert jnp.allclose(out, ref, atol=1e-5, rtol=1e-5), \
        float(jnp.max(jnp.abs(out - ref)))

    # 2) Pallas path: F=256 (half == Hp == 128), small M, bf16 MXU + f32 epilogue.
    B1, T1, F1 = 2, 8, 256
    x1 = jax.random.normal(kx1, (B1, T1, F1), jnp.float32)
    w1, b1 = init_params(kw1, F1)
    out1 = jax.block_until_ready(cascade_layer(x1, w1, b1))
    ref1 = _reference(x1, w1, b1)
    assert out1.shape == (B1, T1, F1 // 2)
    assert jnp.allclose(out1, ref1, atol=3e-2, rtol=3e-2), \
        float(jnp.max(jnp.abs(out1 - ref1)))

    # 3) Pallas path: ragged multi-tile grid (M=1000 -> masked edge block),
    #    nonzero bias, half not a multiple of 128 (F=384 -> half=192, Hp=256).
    B2, T2, F2 = 4, 250, 384
    x2 = jax.random.normal(kx2, (B2, T2, F2), jnp.float32)
    w2, _ = init_params(kw2, F2)
    b2 = 0.1 * jax.random.normal(kb, (F2,), jnp.float32)
    out2 = jax.block_until_ready(cascade_layer(x2, w2, b2))
    ref2 = _reference(x2, w2, b2)
    assert out2.shape == (B2, T2, F2 // 2)
    assert jnp.allclose(out2, ref2, atol=3e-2, rtol=3e-2), \
        float(jnp.max(jnp.abs(out2 - ref2)))

    print("KERNEL_OK")
</pallas_src>

<mosaic_0001>
module attributes {stable_mosaic.version = 11 : i64} {
  func.func @_cascade_kernel(%arg0: i32, %arg1: memref<16x256xf32, #tpu.memory_space<vmem>>, %arg2: memref<256x256xbf16, #tpu.memory_space<vmem>>, %arg3: memref<1x256xf32, #tpu.memory_space<vmem>>, %arg4: memref<16x128xf32, #tpu.memory_space<vmem>>) attributes {dimension_semantics = [#tpu.dimension_semantics<parallel>], iteration_bounds = array<i64: 1>, scalar_prefetch = 0 : i64, scratch_operands = 0 : i64, tpu.core_type = #tpu.core_type<tc>, window_params = [{transform_indices = @transform_0, window_bounds = array<i64: 16, 256>}, {pipeline_mode = #tpu.pipeline_mode<synchronous>, transform_indices = @transform_1, window_bounds = array<i64: 256, 256>}, {pipeline_mode = #tpu.pipeline_mode<synchronous>, transform_indices = @transform_2, window_bounds = array<i64: 1, 256>}, {transform_indices = @transform_3, window_bounds = array<i64: 16, 128>}]} {
    %c0 = arith.constant 0 : index
    %c0_0 = arith.constant 0 : index
    %0 = vector.load %arg1[%c0, %c0_0] : memref<16x256xf32, #tpu.memory_space<vmem>>, vector<16x256xf32>
    %1 = arith.truncf %0 : vector<16x256xf32> to vector<16x256xbf16>
    %c0_1 = arith.constant 0 : index
    %c0_2 = arith.constant 0 : index
    %2 = vector.load %arg2[%c0_1, %c0_2] : memref<256x256xbf16, #tpu.memory_space<vmem>>, vector<256x256xbf16>
    %cst = arith.constant dense<0.000000e+00> : vector<16x256xf32>
    %3 = tpu.matmul %1, %2, %cst {dimension_numbers = #tpu.dot_dimension_numbers<[1], [0], [0], [1], [0, 0, 1, 1], [], []>} : vector<16x256xbf16>, vector<256x256xbf16>, vector<16x256xf32> -> vector<16x256xf32>
    %c0_3 = arith.constant 0 : index
    %c0_4 = arith.constant 0 : index
    %4 = vector.load %arg3[%c0_3, %c0_4] : memref<1x256xf32, #tpu.memory_space<vmem>>, vector<1x256xf32>
    %5 = vector.broadcast %4 : vector<1x256xf32> to vector<16x256xf32>
    %6 = arith.addf %3, %5 : vector<16x256xf32>
    %7 = vector.extract_strided_slice %6 {offsets = [0, 0], sizes = [16, 128], strides = [1, 1]} : vector<16x256xf32> to vector<16x128xf32>
    %8 = vector.extract_strided_slice %6 {offsets = [0, 128], sizes = [16, 128], strides = [1, 1]} : vector<16x256xf32> to vector<16x128xf32>
    %9 = arith.negf %8 : vector<16x128xf32>
    %10 = math.exp %9 : vector<16x128xf32>
    %cst_5 = arith.constant 1.000000e+00 : f32
    %11 = vector.broadcast %cst_5 : f32 to vector<16x128xf32>
    %12 = arith.addf %11, %10 : vector<16x128xf32>
    %13 = arith.divf %11, %12 : vector<16x128xf32>
    %14 = arith.mulf %7, %13 : vector<16x128xf32>
    %c0_6 = arith.constant 0 : index
    %c0_7 = arith.constant 0 : index
    %15 = vector.load %arg4[%c0_6, %c0_7] : memref<16x128xf32, #tpu.memory_space<vmem>>, vector<16x128xf32>
    tpu.vector_store %arg4[%c0_6, %c0_7], %14 {strides = array<i32>} : memref<16x128xf32, #tpu.memory_space<vmem>>, vector<16x128xf32>,
    return
  }
  func.func @transform_0(%arg0: i32) -> (i32, i32) {
    %c0_i32 = arith.constant 0 : i32
    %c0_i32_0 = arith.constant 0 : i32
    return %arg0, %c0_i32 : i32, i32
  }
  func.func @transform_1(%arg0: i32) -> (i32, i32) {
    %c0_i32 = arith.constant 0 : i32
    %c0_i32_0 = arith.constant 0 : i32
    %c0_i32_1 = arith.constant 0 : i32
    return %c0_i32, %c0_i32_0 : i32, i32
  }
  func.func @transform_2(%arg0: i32) -> (i32, i32) {
    %c0_i32 = arith.constant 0 : i32
    %c0_i32_0 = arith.constant 0 : i32
    %c0_i32_1 = arith.constant 0 : i32
    return %c0_i32, %c0_i32_0 : i32, i32
  }
  func.func @transform_3(%arg0: i32) -> (i32, i32) {
    %c0_i32 = arith.constant 0 : i32
    %c0_i32_0 = arith.constant 0 : i32
    return %arg0, %c0_i32 : i32, i32
  }
}

module attributes {stable_mosaic.version = 11 : i64} {
  func.func @_cascade_kernel(%arg0: i32, %arg1: memref<16x256xf32, #tpu.memory_space<vmem>>, %arg2: memref<256x256xbf16, #tpu.memory_space<vmem>>, %arg3: memref<1x256xf32, #tpu.memory_space<vmem>>, %arg4: memref<16x128xf32, #tpu.memory_space<vmem>>) attributes {dimension_semantics = [#tpu.dimension_semantics<parallel>], iteration_bounds = array<i64: 1>, scalar_prefetch = 0 : i64, scratch_operands = 0 : i64, tpu.core_type = #tpu.core_type<tc>, window_params = [{transform_indices = @transform_0, window_bounds = array<i64: 16, 256>}, {pipeline_mode = #tpu.pipeline_mode<synchronous>, transform_indices = @transform_1, window_bounds = array<i64: 256, 256>}, {pipeline_mode = #tpu.pipeline_mode<synchronous>, transform_indices = @transform_2, window_bounds = array<i64: 1, 256>}, {transform_indices = @transform_3, window_bounds = array<i64: 16, 128>}]} {
    %c0 = arith.constant 0 : index
    %c0_0 = arith.constant 0 : index
    %0 = vector.load %arg1[%c0, %c0_0] : memref<16x256xf32, #tpu.memory_space<vmem>>, vector<16x256xf32>
    %1 = arith.truncf %0 : vector<16x256xf32> to vector<16x256xbf16>
    %c0_1 = arith.constant 0 : index
    %c0_2 = arith.constant 0 : index
    %2 = vector.load %arg2[%c0_1, %c0_2] : memref<256x256xbf16, #tpu.memory_space<vmem>>, vector<256x256xbf16>
    %cst = arith.constant dense<0.000000e+00> : vector<16x256xf32>
    %3 = tpu.matmul %1, %2, %cst {dimension_numbers = #tpu.dot_dimension_numbers<[1], [0], [0], [1], [0, 0, 1, 1], [], []>} : vector<16x256xbf16>, vector<256x256xbf16>, vector<16x256xf32> -> vector<16x256xf32>
    %c0_3 = arith.constant 0 : index
    %c0_4 = arith.constant 0 : index
    %4 = vector.load %arg3[%c0_3, %c0_4] : memref<1x256xf32, #tpu.memory_space<vmem>>, vector<1x256xf32>
    %5 = vector.broadcast %4 : vector<1x256xf32> to vector<16x256xf32>
    %6 = arith.addf %3, %5 : vector<16x256xf32>
    %7 = vector.extract_strided_slice %6 {offsets = [0, 0], sizes = [16, 128], strides = [1, 1]} : vector<16x256xf32> to vector<16x128xf32>
    %8 = vector.extract_strided_slice %6 {offsets = [0, 128], sizes = [16, 128], strides = [1, 1]} : vector<16x256xf32> to vector<16x128xf32>
    %9 = arith.negf %8 : vector<16x128xf32>
    %10 = math.exp %9 : vector<16x128xf32>
    %cst_5 = arith.constant 1.000000e+00 : f32
    %11 = vector.broadcast %cst_5 : f32 to vector<16x128xf32>
    %12 = arith.addf %11, %10 : vector<16x128xf32>
    %13 = arith.divf %11, %12 : vector<16x128xf32>
    %14 = arith.mulf %7, %13 : vector<16x128xf32>
    %c0_6 = arith.constant 0 : index
    %c0_7 = arith.constant 0 : index
    %15 = vector.load %arg4[%c0_6, %c0_7] : memref<16x128xf32, #tpu.memory_space<vmem>>, vector<16x128xf32>
    tpu.vector_store %arg4[%c0_6, %c0_7], %14 {strides = array<i32>} : memref<16x128xf32, #tpu.memory_space<vmem>>, vector<16x128xf32>,
    return
  }
  func.func @transform_0(%arg0: i32) -> (i32, i32) {
    %c0_i32 = arith.constant 0 : i32
    %c0_i32_0 = arith.constant 0 : i32
    return %arg0, %c0_i32 : i32, i32
  }
  func.func @transform_1(%arg0: i32) -> (i32, i32) {
    %c0_i32 = arith.constant 0 : i32
    %c0_i32_0 = arith.constant 0 : i32
    %c0_i32_1 = arith.constant 0 : i32
    return %c0_i32, %c0_i32_0 : i32, i32
  }
  func.func @transform_2(%arg0: i32) -> (i32, i32) {
    %c0_i32 = arith.constant 0 : i32
    %c0_i32_0 = arith.constant 0 : i32
    %c0_i32_1 = arith.constant 0 : i32
    return %c0_i32, %c0_i32_0 : i32, i32
  }
  func.func @transform_3(%arg0: i32) -> (i32, i32) {
    %c0_i32 = arith.constant 0 : i32
    %c0_i32_0 = arith.constant 0 : i32
    return %arg0, %c0_i32 : i32, i32
  }
}

</mosaic_0001>

<llo_original>
// kernel: tpu_custom_call.1
$region0: #{tpu_custom_call.1}
  #allocation0 [shape = 'u32[]', space=smem, size = 0x4, offset = 0x4, fixed_abs, tag = 'smem constant byte address 0x4 - core index']
  #allocation1 [shape = 'u32[144,128]{1,0:T(1,128)}', space=vmem, size = 0x12000, scoped, tag = 'internal scratch']
  %s0 = inlined_call_operand.hbm [shape: f32[16,256], index: 0, kind: input, shape index: {}]
  %s1 = inlined_call_operand.hbm [shape: bf16[256,256], index: 1, kind: input, shape index: {}]
  %s2 = inlined_call_operand.vmem [shape: f32[1,256], index: 2, kind: input, shape index: {}]
  %s3 = inlined_call_operand.hbm [shape: f32[16,128], index: 3, kind: output, shape index: {}]
  %s4 = sld [smem:[#allocation0]]
  $region30: #{tpu_custom_call.1} parent=0
    _
  %s6 = ssub.s32 1, %s4
  %s7 = scalar_select 0, %s6, %s4
  $region1: #{tpu_custom_call.1} parent=0
    #allocation2 [shape = 'u8[16384]{0}', space=vmem, size = 0x4000, scoped, tag = 'input window, operand 0, single buffered']
    #allocation3 [shape = 's32[1]{0}', space=sflag, size = 0x4, scoped, tag = 'scoped memory for tpu_custom_call.1']
    #allocation4 [shape = 's32[1]{0}', space=sflag, size = 0x4, scoped, tag = 'scoped memory for tpu_custom_call.1']
    #allocation5 [shape = 'u8[131072]{0}', space=vmem, size = 0x20000, scoped, tag = 'input window, operand 1, single buffered']
    #allocation6 [shape = 's32[1]{0}', space=sflag, size = 0x4, scoped, tag = 'scoped memory for tpu_custom_call.1']
    #allocation7 [shape = 'u8[8192]{0}', space=vmem, size = 0x2000, scoped, tag = 'output window, operand 0, single buffered']
    %8 = vsyncpa [#allocation3], 0
    %9 = vsyncpa [#allocation6], 0
    %10 = vsyncpa [#allocation4], 0
    // Predicated region
    $region2: #{tpu_custom_call.1} parent=1 // pred_check
      _
    $region3: #{tpu_custom_call.1} parent=1 // pred_check_branch
      %12 = sbr.rel (0) target = $region5
    $region4: #{tpu_custom_call.1} parent=1 // pred_region
      %s14 = ssub.s32 512, 512
      %15 = vsyncadd [#allocation3], %s14
      %s16 = sshll.u32 [#allocation2], 4
      %s17 = int_to_ptr.vmem [resolvable:$true] %s16
      %22 = dma.hbm_to_vmem [thread:$0]  %s0, 512, %s17, [#allocation3], 256, 256, 16
    $region5: #{tpu_custom_call.1} parent=1 // pred_fallthru
      _
    // Predicated region
    $region6: #{tpu_custom_call.1} parent=1 // pred_check
      _
    $region7: #{tpu_custom_call.1} parent=1 // pred_check_branch
      %24 = sbr.rel (0) target = $region9
    $region8: #{tpu_custom_call.1} parent=1 // pred_region
      %s26 = ssub.s32 4096, 4096
      %27 = vsyncadd [#allocation6], %s26
      %s28 = sshll.u32 [#allocation5], 4
      %s29 = int_to_ptr.vmem [resolvable:$true] %s28
      %34 = dma.hbm_to_vmem [thread:$0]  %s1, 4096, %s29, [#allocation6], 128, 128, 8
    $region9: #{tpu_custom_call.1} parent=1 // pred_fallthru
      _
    // Predicated region
    $region10: #{tpu_custom_call.1} parent=1 // pred_check
      _
    $region11: #{tpu_custom_call.1} parent=1 // pred_check_branch
      %36 = sbr.rel (0) target = $region13
    $region12: #{tpu_custom_call.1} parent=1 // pred_region
      _
    $region13: #{tpu_custom_call.1} parent=1 // pred_fallthru
      _
    // Predicated region
    $region14: #{tpu_custom_call.1} parent=1 // pred_check
      _
    $region15: #{tpu_custom_call.1} parent=1 // pred_check_branch
      %38 = sbr.rel (0) target = $region17
    $region16: #{tpu_custom_call.1} parent=1 // pred_region
      %39 = dma.done [#allocation3], 512
    $region17: #{tpu_custom_call.1} parent=1 // pred_fallthru
      _
    // Predicated region
    $region18: #{tpu_custom_call.1} parent=1 // pred_check
      _
    $region19: #{tpu_custom_call.1} parent=1 // pred_check_branch
      %41 = sbr.rel (0) target = $region21
    $region20: #{tpu_custom_call.1} parent=1 // pred_region
      %42 = dma.done [#allocation6], 4096
    $region21: #{tpu_custom_call.1} parent=1 // pred_fallthru
      _
    %v43 = vld [vmem:[#allocation2] sm:$0xff]
    %v44 = vld [vmem:[#allocation2 + $0x8] sm:$0xff]
    %v45 = vld [vmem:[#allocation2 + $0x10] sm:$0xff]
    %v46 = vld [vmem:[#allocation2 + $0x18] sm:$0xff]
    %v47 = vpack.c.bf16 %v45, %v43
    %v48 = vpack.c.bf16 %v46, %v44
    %v49 = vld [vmem:[#allocation5] sm:$0xff]
    %v50 = vld [vmem:[#allocation5 + $0x8] sm:$0xff]
    %v51 = vld [vmem:[#allocation5 + $0x10] sm:$0xff]
    %v52 = vld [vmem:[#allocation5 + $0x18] sm:$0xff]
    %v53 = vld [vmem:[#allocation5 + $0x20] sm:$0xff]
    %v54 = vld [vmem:[#allocation5 + $0x28] sm:$0xff]
    %v55 = vld [vmem:[#allocation5 + $0x30] sm:$0xff]
    %v56 = vld [vmem:[#allocation5 + $0x38] sm:$0xff]
    %v57 = vld [vmem:[#allocation5 + $0x40] sm:$0xff]
    %v58 = vld [vmem:[#allocation5 + $0x48] sm:$0xff]
    %v59 = vld [vmem:[#allocation5 + $0x50] sm:$0xff]
    %v60 = vld [vmem:[#allocation5 + $0x58] sm:$0xff]
    %v61 = vld [vmem:[#allocation5 + $0x60] sm:$0xff]
    %v62 = vld [vmem:[#allocation5 + $0x68] sm:$0xff]
    %v63 = vld [vmem:[#allocation5 + $0x70] sm:$0xff]
    %v64 = vld [vmem:[#allocation5 + $0x78] sm:$0xff]
    %v65 = vld [vmem:[#allocation5 + $0x80] sm:$0xff]
    %v66 = vld [vmem:[#allocation5 + $0x88] sm:$0xff]
    %v67 = vld [vmem:[#allocation5 + $0x90] sm:$0xff]
    %v68 = vld [vmem:[#allocation5 + $0x98] sm:$0xff]
    %v69 = vld [vmem:[#allocation5 + $0xa0] sm:$0xff]
    %v70 = vld [vmem:[#allocation5 + $0xa8] sm:$0xff]
    %v71 = vld [vmem:[#allocation5 + $0xb0] sm:$0xff]
    %v72 = vld [vmem:[#allocation5 + $0xb8] sm:$0xff]
    %v73 = vld [vmem:[#allocation5 + $0xc0] sm:$0xff]
    %v74 = vld [vmem:[#allocation5 + $0xc8] sm:$0xff]
    %v75 = vld [vmem:[#allocation5 + $0xd0] sm:$0xff]
    %v76 = vld [vmem:[#allocation5 + $0xd8] sm:$0xff]
    %v77 = vld [vmem:[#allocation5 + $0xe0] sm:$0xff]
    %v78 = vld [vmem:[#allocation5 + $0xe8] sm:$0xff]
    %v79 = vld [vmem:[#allocation5 + $0xf0] sm:$0xff]
    %v80 = vld [vmem:[#allocation5 + $0xf8] sm:$0xff]
    %v81 = vld [vmem:[%s2] sm:$0x3]
    %v83 = vlaneseq
    %v84 = vshrl.u32 %v83, 7
    %v85 = vsub.s32 0, %v84
    %v86 = vrot.slane %v81, %v85
    %v87 = vlaneseq
    %v88 = vshrl.u32 %v87, 7
    %v89 = vsub.s32 1, %v88
    %v90 = vrot.slane %v81, %v89
    %v125 = vunpack.c.l.b16 %v49
    %v126 = vunpack.c.h.b16 %v49
    %v127 = vunpack.c.l.b16 %v50
    %v128 = vunpack.c.h.b16 %v50
    %v129 = vunpack.c.l.b16 %v51
    %v130 = vunpack.c.h.b16 %v51
    %v131 = vunpack.c.l.b16 %v52
    %v132 = vunpack.c.h.b16 %v52
    %v133 = vunpack.c.l.b16 %v53
    %v134 = vunpack.c.h.b16 %v53
    %v135 = vunpack.c.l.b16 %v54
    %v136 = vunpack.c.h.b16 %v54
    %v137 = vunpack.c.l.b16 %v55
    %v138 = vunpack.c.h.b16 %v55
    %v139 = vunpack.c.l.b16 %v56
    %v140 = vunpack.c.h.b16 %v56
    %v141 = vunpack.c.l.b16 %v57
    %v142 = vunpack.c.h.b16 %v57
    %v143 = vunpack.c.l.b16 %v58
    %v144 = vunpack.c.h.b16 %v58
    %v145 = vunpack.c.l.b16 %v59
    %v146 = vunpack.c.h.b16 %v59
    %v147 = vunpack.c.l.b16 %v60
    %v148 = vunpack.c.h.b16 %v60
    %v149 = vunpack.c.l.b16 %v61
    %v150 = vunpack.c.h.b16 %v61
    %v151 = vunpack.c.l.b16 %v62
    %v152 = vunpack.c.h.b16 %v62
    %v153 = vunpack.c.l.b16 %v63
    %v154 = vunpack.c.h.b16 %v63
    %v155 = vunpack.c.l.b16 %v64
    %v156 = vunpack.c.h.b16 %v64
    %v157 = vunpack.c.l.b16 %v65
    %v158 = vunpack.c.h.b16 %v65
    %v159 = vunpack.c.l.b16 %v66
    %v160 = vunpack.c.h.b16 %v66
    %v161 = vunpack.c.l.b16 %v67
    %v162 = vunpack.c.h.b16 %v67
    %v163 = vunpack.c.l.b16 %v68
    %v164 = vunpack.c.h.b16 %v68
    %v165 = vunpack.c.l.b16 %v69
    %v166 = vunpack.c.h.b16 %v69
    %v167 = vunpack.c.l.b16 %v70
    %v168 = vunpack.c.h.b16 %v70
    %v169 = vunpack.c.l.b16 %v71
    %v170 = vunpack.c.h.b16 %v71
    %v171 = vunpack.c.l.b16 %v72
    %v172 = vunpack.c.h.b16 %v72
    %v173 = vunpack.c.l.b16 %v73
    %v174 = vunpack.c.h.b16 %v73
    %v175 = vunpack.c.l.b16 %v74
    %v176 = vunpack.c.h.b16 %v74
    %v177 = vunpack.c.l.b16 %v75
    %v178 = vunpack.c.h.b16 %v75
    %v179 = vunpack.c.l.b16 %v76
    %v180 = vunpack.c.h.b16 %v76
    %v181 = vunpack.c.l.b16 %v77
    %v182 = vunpack.c.h.b16 %v77
    %v183 = vunpack.c.l.b16 %v78
    %v184 = vunpack.c.h.b16 %v78
    %v185 = vunpack.c.l.b16 %v79
    %v186 = vunpack.c.h.b16 %v79
    %v187 = vunpack.c.l.b16 %v80
    %v188 = vunpack.c.h.b16 %v80
    %v189 = vpack.c.b16 %v127, %v125
    %v190 = vpack.c.b16 %v128, %v126
    %v191 = vpack.c.b16 %v131, %v129
    %v192 = vpack.c.b16 %v132, %v130
    %v193 = vpack.c.b16 %v135, %v133
    %v194 = vpack.c.b16 %v136, %v134
    %v195 = vpack.c.b16 %v139, %v137
    %v196 = vpack.c.b16 %v140, %v138
    %v197 = vpack.c.b16 %v143, %v141
    %v198 = vpack.c.b16 %v144, %v142
    %v199 = vpack.c.b16 %v147, %v145
    %v200 = vpack.c.b16 %v148, %v146
    %v201 = vpack.c.b16 %v151, %v149
    %v202 = vpack.c.b16 %v152, %v150
    %v203 = vpack.c.b16 %v155, %v153
    %v204 = vpack.c.b16 %v156, %v154
    %v205 = vpack.c.b16 %v159, %v157
    %v206 = vpack.c.b16 %v160, %v158
    %v207 = vpack.c.b16 %v163, %v161
    %v208 = vpack.c.b16 %v164, %v162
    %v209 = vpack.c.b16 %v167, %v165
    %v210 = vpack.c.b16 %v168, %v166
    %v211 = vpack.c.b16 %v171, %v169
    %v212 = vpack.c.b16 %v172, %v170
    %v213 = vpack.c.b16 %v175, %v173
    %v214 = vpack.c.b16 %v176, %v174
    %v215 = vpack.c.b16 %v179, %v177
    %v216 = vpack.c.b16 %v180, %v178
    %v217 = vpack.c.b16 %v183, %v181
    %v218 = vpack.c.b16 %v184, %v182
    %v219 = vpack.c.b16 %v187, %v185
    %v220 = vpack.c.b16 %v188, %v186
    %253 = vmatprep.subr.bf16.mxu0 %v190
    %254 = vmatpush1.bf16.msra.mxu0 %v189
    %255 = vmatprep.subr.bf16.mxu0 %v192
    %256 = vmatpush1.bf16.msra.mxu0 %v191
    %257 = vmatprep.subr.bf16.mxu0 %v194
    %258 = vmatpush1.bf16.msra.mxu0 %v193
    %259 = vmatprep.subr.bf16.mxu0 %v196
    %260 = vmatpush1.bf16.msra.mxu0 %v195
    %261 = vmatprep.subr.bf16.mxu0 %v198
    %262 = vmatpush1.bf16.msra.mxu0 %v197
    %263 = vmatprep.subr.bf16.mxu0 %v200
    %264 = vmatpush1.bf16.msra.mxu0 %v199
    %265 = vmatprep.subr.bf16.mxu0 %v202
    %266 = vmatpush1.bf16.msra.mxu0 %v201
    %267 = vmatprep.subr.bf16.mxu0 %v204
    %268 = vmatpush1.bf16.msra.mxu0 %v203
    %269 = vmatprep.subr.bf16.mxu0 %v206
    %270 = vmatpush1.bf16.msra.mxu0 %v205
    %271 = vmatprep.subr.bf16.mxu0 %v208
    %272 = vmatpush1.bf16.msra.mxu0 %v207
    %273 = vmatprep.subr.bf16.mxu0 %v210
    %274 = vmatpush1.bf16.msra.mxu0 %v209
    %275 = vmatprep.subr.bf16.mxu0 %v212
    %276 = vmatpush1.bf16.msra.mxu0 %v211
    %277 = vmatprep.subr.bf16.mxu0 %v214
    %278 = vmatpush1.bf16.msra.mxu0 %v213
    %279 = vmatprep.subr.bf16.mxu0 %v216
    %280 = vmatpush1.bf16.msra.mxu0 %v215
    %281 = vmatprep.subr.bf16.mxu0 %v218
    %282 = vmatpush1.bf16.msra.mxu0 %v217
    %283 = vmatprep.subr.bf16.mxu0 %v220
    %284 = vmatpush1.bf16.msra.mxu0 %v219
    %285 = vmatprep.mubr.bf16.mxu0 %v48
    %286 = vmatmul.mubr.bf16.gmra.mrb[0].mxu0 %v47
    %v287 = vpop.f32.mrb[0].mxu0
    %v288 = vadd.f32 %v86, %v287
    %v289 = vpop.f32.mrb[0].mxu0
    %v290 = vadd.f32 %v90, %v289
    %v291 = vpop.f32.mrb[0].mxu0
    %v292 = vadd.f32 %v86, %v291
    %v293 = vpop.f32.mrb[0].mxu0
    %v294 = vadd.f32 %v90, %v293
    %295 = vdwg.mxu0
    %v296 = vxor.u32 %v290, 2147483648
    %v297 = vxor.u32 %v294, 2147483648
    %v298 = vmul.f32 %v296, 1.442695
    %v299 = vpow.pop %v298
    %v300 = vmul.f32 %v297, 1.442695
    %v301 = vpow.pop %v300
    %v302 = vadd.f32 %v299, 1.0
    %v303 = vadd.f32 %v301, 1.0
    %v304 = vrcp.pop %v302
    %v305 = vmul.f32 1.0, %v304
    %v306 = vrcp.pop %v303
    %v307 = vmul.f32 1.0, %v306
    %v308 = vmul.f32 %v288, %v305
    %v309 = vmul.f32 %v292, %v307
    %310 = vst [vmem:[#allocation7] sm:$0xff] %v308
    %311 = vst [vmem:[#allocation7 + $0x8] sm:$0xff] %v309
    // Predicated region
    $region22: #{tpu_custom_call.1} parent=1 // pred_check
      _
    $region23: #{tpu_custom_call.1} parent=1 // pred_check_branch
      %313 = sbr.rel (0) target = $region25
    $region24: #{tpu_custom_call.1} parent=1 // pred_region
      %s315 = ssub.s32 256, 256
      %316 = vsyncadd [#allocation4], %s315
      %s317 = sshll.u32 [#allocation7], 4
      %s318 = int_to_ptr.vmem [resolvable:$true] %s317
      %323 = dma.vmem_to_hbm [thread:$0]  %s318, 256, %s3, [#allocation4], 128, 128, 8
    $region25: #{tpu_custom_call.1} parent=1 // pred_fallthru
      _
    // Predicated region
    $region26: #{tpu_custom_call.1} parent=1 // pred_check
      _
    $region27: #{tpu_custom_call.1} parent=1 // pred_check_branch
      %325 = sbr.rel (0) target = $region29
    $region28: #{tpu_custom_call.1} parent=1 // pred_region
      %326 = dma.done [#allocation4], 256
    $region29: #{tpu_custom_call.1} parent=1 // pred_fallthru
      _
    %327 = vsyncpa [#allocation3], 1
    %328 = vsyncpa [#allocation6], 1
    %329 = vsyncpa [#allocation4], 1

// kernel: tpu_custom_call.1
$region0: #{tpu_custom_call.1}
  #allocation0 [shape = 'u32[]', space=smem, size = 0x4, offset = 0x4, fixed_abs, tag = 'smem constant byte address 0x4 - core index']
  #allocation1 [shape = 'u32[144,128]{1,0:T(1,128)}', space=vmem, size = 0x12000, scoped, tag = 'internal scratch']
  %s0 = inlined_call_operand.hbm [shape: f32[16,256], index: 0, kind: input, shape index: {}]
  %s1 = inlined_call_operand.hbm [shape: bf16[256,256], index: 1, kind: input, shape index: {}]
  %s2 = inlined_call_operand.vmem [shape: f32[1,256], index: 2, kind: input, shape index: {}]
  %s3 = inlined_call_operand.hbm [shape: f32[16,128], index: 3, kind: output, shape index: {}]
  %s4 = sld [smem:[#allocation0]]
  $region30: #{tpu_custom_call.1} parent=0
    _
  %s6 = ssub.s32 1, %s4
  %s7 = scalar_select 0, %s6, %s4
  $region1: #{tpu_custom_call.1} parent=0
    #allocation2 [shape = 'u8[16384]{0}', space=vmem, size = 0x4000, scoped, tag = 'input window, operand 0, single buffered']
    #allocation3 [shape = 's32[1]{0}', space=sflag, size = 0x4, scoped, tag = 'scoped memory for tpu_custom_call.1']
    #allocation4 [shape = 's32[1]{0}', space=sflag, size = 0x4, scoped, tag = 'scoped memory for tpu_custom_call.1']
    #allocation5 [shape = 'u8[131072]{0}', space=vmem, size = 0x20000, scoped, tag = 'input window, operand 1, single buffered']
    #allocation6 [shape = 's32[1]{0}', space=sflag, size = 0x4, scoped, tag = 'scoped memory for tpu_custom_call.1']
    #allocation7 [shape = 'u8[8192]{0}', space=vmem, size = 0x2000, scoped, tag = 'output window, operand 0, single buffered']
    %8 = vsyncpa [#allocation3], 0
    %9 = vsyncpa [#allocation6], 0
    %10 = vsyncpa [#allocation4], 0
    // Predicated region
    $region2: #{tpu_custom_call.1} parent=1 // pred_check
      _
    $region3: #{tpu_custom_call.1} parent=1 // pred_check_branch
      %12 = sbr.rel (0) target = $region5
    $region4: #{tpu_custom_call.1} parent=1 // pred_region
      %s14 = ssub.s32 512, 512
      %15 = vsyncadd [#allocation3], %s14
      %s16 = sshll.u32 [#allocation2], 4
      %s17 = int_to_ptr.vmem [resolvable:$true] %s16
      %22 = dma.hbm_to_vmem [thread:$0]  %s0, 512, %s17, [#allocation3], 256, 256, 16
    $region5: #{tpu_custom_call.1} parent=1 // pred_fallthru
      _
    // Predicated region
    $region6: #{tpu_custom_call.1} parent=1 // pred_check
      _
    $region7: #{tpu_custom_call.1} parent=1 // pred_check_branch
      %24 = sbr.rel (0) target = $region9
    $region8: #{tpu_custom_call.1} parent=1 // pred_region
      %s26 = ssub.s32 4096, 4096
      %27 = vsyncadd [#allocation6], %s26
      %s28 = sshll.u32 [#allocation5], 4
      %s29 = int_to_ptr.vmem [resolvable:$true] %s28
      %34 = dma.hbm_to_vmem [thread:$0]  %s1, 4096, %s29, [#allocation6], 128, 128, 8
    $region9: #{tpu_custom_call.1} parent=1 // pred_fallthru
      _
    // Predicated region
    $region10: #{tpu_custom_call.1} parent=1 // pred_check
      _
    $region11: #{tpu_custom_call.1} parent=1 // pred_check_branch
      %36 = sbr.rel (0) target = $region13
    $region12: #{tpu_custom_call.1} parent=1 // pred_region
      _
    $region13: #{tpu_custom_call.1} parent=1 // pred_fallthru
      _
    // Predicated region
    $region14: #{tpu_custom_call.1} parent=1 // pred_check
      _
    $region15: #{tpu_custom_call.1} parent=1 // pred_check_branch
      %38 = sbr.rel (0) target = $region17
    $region16: #{tpu_custom_call.1} parent=1 // pred_region
      %39 = dma.done [#allocation3], 512
    $region17: #{tpu_custom_call.1} parent=1 // pred_fallthru
      _
    // Predicated region
    $region18: #{tpu_custom_call.1} parent=1 // pred_check
      _
    $region19: #{tpu_custom_call.1} parent=1 // pred_check_branch
      %41 = sbr.rel (0) target = $region21
    $region20: #{tpu_custom_call.1} parent=1 // pred_region
      %42 = dma.done [#allocation6], 4096
    $region21: #{tpu_custom_call.1} parent=1 // pred_fallthru
      _
    %v43 = vld [vmem:[#allocation2] sm:$0xff]
    %v44 = vld [vmem:[#allocation2 + $0x8] sm:$0xff]
    %v45 = vld [vmem:[#allocation2 + $0x10] sm:$0xff]
    %v46 = vld [vmem:[#allocation2 + $0x18] sm:$0xff]
    %v47 = vpack.c.bf16 %v45, %v43
    %v48 = vpack.c.bf16 %v46, %v44
    %v49 = vld [vmem:[#allocation5] sm:$0xff]
    %v50 = vld [vmem:[#allocation5 + $0x8] sm:$0xff]
    %v51 = vld [vmem:[#allocation5 + $0x10] sm:$0xff]
    %v52 = vld [vmem:[#allocation5 + $0x18] sm:$0xff]
    %v53 = vld [vmem:[#allocation5 + $0x20] sm:$0xff]
    %v54 = vld [vmem:[#allocation5 + $0x28] sm:$0xff]
    %v55 = vld [vmem:[#allocation5 + $0x30] sm:$0xff]
    %v56 = vld [vmem:[#allocation5 + $0x38] sm:$0xff]
    %v57 = vld [vmem:[#allocation5 + $0x40] sm:$0xff]
    %v58 = vld [vmem:[#allocation5 + $0x48] sm:$0xff]
    %v59 = vld [vmem:[#allocation5 + $0x50] sm:$0xff]
    %v60 = vld [vmem:[#allocation5 + $0x58] sm:$0xff]
    %v61 = vld [vmem:[#allocation5 + $0x60] sm:$0xff]
    %v62 = vld [vmem:[#allocation5 + $0x68] sm:$0xff]
    %v63 = vld [vmem:[#allocation5 + $0x70] sm:$0xff]
    %v64 = vld [vmem:[#allocation5 + $0x78] sm:$0xff]
    %v65 = vld [vmem:[#allocation5 + $0x80] sm:$0xff]
    %v66 = vld [vmem:[#allocation5 + $0x88] sm:$0xff]
    %v67 = vld [vmem:[#allocation5 + $0x90] sm:$0xff]
    %v68 = vld [vmem:[#allocation5 + $0x98] sm:$0xff]
    %v69 = vld [vmem:[#allocation5 + $0xa0] sm:$0xff]
    %v70 = vld [vmem:[#allocation5 + $0xa8] sm:$0xff]
    %v71 = vld [vmem:[#allocation5 + $0xb0] sm:$0xff]
    %v72 = vld [vmem:[#allocation5 + $0xb8] sm:$0xff]
    %v73 = vld [vmem:[#allocation5 + $0xc0] sm:$0xff]
    %v74 = vld [vmem:[#allocation5 + $0xc8] sm:$0xff]
    %v75 = vld [vmem:[#allocation5 + $0xd0] sm:$0xff]
    %v76 = vld [vmem:[#allocation5 + $0xd8] sm:$0xff]
    %v77 = vld [vmem:[#allocation5 + $0xe0] sm:$0xff]
    %v78 = vld [vmem:[#allocation5 + $0xe8] sm:$0xff]
    %v79 = vld [vmem:[#allocation5 + $0xf0] sm:$0xff]
    %v80 = vld [vmem:[#allocation5 + $0xf8] sm:$0xff]
    %v81 = vld [vmem:[%s2] sm:$0x3]
    %v83 = vlaneseq
    %v84 = vshrl.u32 %v83, 7
    %v85 = vsub.s32 0, %v84
    %v86 = vrot.slane %v81, %v85
    %v87 = vlaneseq
    %v88 = vshrl.u32 %v87, 7
    %v89 = vsub.s32 1, %v88
    %v90 = vrot.slane %v81, %v89
    %v125 = vunpack.c.l.b16 %v49
    %v126 = vunpack.c.h.b16 %v49
    %v127 = vunpack.c.l.b16 %v50
    %v128 = vunpack.c.h.b16 %v50
    %v129 = vunpack.c.l.b16 %v51
    %v130 = vunpack.c.h.b16 %v51
    %v131 = vunpack.c.l.b16 %v52
    %v132 = vunpack.c.h.b16 %v52
    %v133 = vunpack.c.l.b16 %v53
    %v134 = vunpack.c.h.b16 %v53
    %v135 = vunpack.c.l.b16 %v54
    %v136 = vunpack.c.h.b16 %v54
    %v137 = vunpack.c.l.b16 %v55
    %v138 = vunpack.c.h.b16 %v55
    %v139 = vunpack.c.l.b16 %v56
    %v140 = vunpack.c.h.b16 %v56
    %v141 = vunpack.c.l.b16 %v57
    %v142 = vunpack.c.h.b16 %v57
    %v143 = vunpack.c.l.b16 %v58
    %v144 = vunpack.c.h.b16 %v58
    %v145 = vunpack.c.l.b16 %v59
    %v146 = vunpack.c.h.b16 %v59
    %v147 = vunpack.c.l.b16 %v60
    %v148 = vunpack.c.h.b16 %v60
    %v149 = vunpack.c.l.b16 %v61
    %v150 = vunpack.c.h.b16 %v61
    %v151 = vunpack.c.l.b16 %v62
    %v152 = vunpack.c.h.b16 %v62
    %v153 = vunpack.c.l.b16 %v63
    %v154 = vunpack.c.h.b16 %v63
    %v155 = vunpack.c.l.b16 %v64
    %v156 = vunpack.c.h.b16 %v64
    %v157 = vunpack.c.l.b16 %v65
    %v158 = vunpack.c.h.b16 %v65
    %v159 = vunpack.c.l.b16 %v66
    %v160 = vunpack.c.h.b16 %v66
    %v161 = vunpack.c.l.b16 %v67
    %v162 = vunpack.c.h.b16 %v67
    %v163 = vunpack.c.l.b16 %v68
    %v164 = vunpack.c.h.b16 %v68
    %v165 = vunpack.c.l.b16 %v69
    %v166 = vunpack.c.h.b16 %v69
    %v167 = vunpack.c.l.b16 %v70
    %v168 = vunpack.c.h.b16 %v70
    %v169 = vunpack.c.l.b16 %v71
    %v170 = vunpack.c.h.b16 %v71
    %v171 = vunpack.c.l.b16 %v72
    %v172 = vunpack.c.h.b16 %v72
    %v173 = vunpack.c.l.b16 %v73
    %v174 = vunpack.c.h.b16 %v73
    %v175 = vunpack.c.l.b16 %v74
    %v176 = vunpack.c.h.b16 %v74
    %v177 = vunpack.c.l.b16 %v75
    %v178 = vunpack.c.h.b16 %v75
    %v179 = vunpack.c.l.b16 %v76
    %v180 = vunpack.c.h.b16 %v76
    %v181 = vunpack.c.l.b16 %v77
    %v182 = vunpack.c.h.b16 %v77
    %v183 = vunpack.c.l.b16 %v78
    %v184 = vunpack.c.h.b16 %v78
    %v185 = vunpack.c.l.b16 %v79
    %v186 = vunpack.c.h.b16 %v79
    %v187 = vunpack.c.l.b16 %v80
    %v188 = vunpack.c.h.b16 %v80
    %v189 = vpack.c.b16 %v127, %v125
    %v190 = vpack.c.b16 %v128, %v126
    %v191 = vpack.c.b16 %v131, %v129
    %v192 = vpack.c.b16 %v132, %v130
    %v193 = vpack.c.b16 %v135, %v133
    %v194 = vpack.c.b16 %v136, %v134
    %v195 = vpack.c.b16 %v139, %v137
    %v196 = vpack.c.b16 %v140, %v138
    %v197 = vpack.c.b16 %v143, %v141
    %v198 = vpack.c.b16 %v144, %v142
    %v199 = vpack.c.b16 %v147, %v145
    %v200 = vpack.c.b16 %v148, %v146
    %v201 = vpack.c.b16 %v151, %v149
    %v202 = vpack.c.b16 %v152, %v150
    %v203 = vpack.c.b16 %v155, %v153
    %v204 = vpack.c.b16 %v156, %v154
    %v205 = vpack.c.b16 %v159, %v157
    %v206 = vpack.c.b16 %v160, %v158
    %v207 = vpack.c.b16 %v163, %v161
    %v208 = vpack.c.b16 %v164, %v162
    %v209 = vpack.c.b16 %v167, %v165
    %v210 = vpack.c.b16 %v168, %v166
    %v211 = vpack.c.b16 %v171, %v169
    %v212 = vpack.c.b16 %v172, %v170
    %v213 = vpack.c.b16 %v175, %v173
    %v214 = vpack.c.b16 %v176, %v174
    %v215 = vpack.c.b16 %v179, %v177
    %v216 = vpack.c.b16 %v180, %v178
    %v217 = vpack.c.b16 %v183, %v181
    %v218 = vpack.c.b16 %v184, %v182
    %v219 = vpack.c.b16 %v187, %v185
    %v220 = vpack.c.b16 %v188, %v186
    %253 = vmatprep.subr.bf16.mxu0 %v190
    %254 = vmatpush1.bf16.msra.mxu0 %v189
    %255 = vmatprep.subr.bf16.mxu0 %v192
    %256 = vmatpush1.bf16.msra.mxu0 %v191
    %257 = vmatprep.subr.bf16.mxu0 %v194
    %258 = vmatpush1.bf16.msra.mxu0 %v193
    %259 = vmatprep.subr.bf16.mxu0 %v196
    %260 = vmatpush1.bf16.msra.mxu0 %v195
    %261 = vmatprep.subr.bf16.mxu0 %v198
    %262 = vmatpush1.bf16.msra.mxu0 %v197
    %263 = vmatprep.subr.bf16.mxu0 %v200
    %264 = vmatpush1.bf16.msra.mxu0 %v199
    %265 = vmatprep.subr.bf16.mxu0 %v202
    %266 = vmatpush1.bf16.msra.mxu0 %v201
    %267 = vmatprep.subr.bf16.mxu0 %v204
    %268 = vmatpush1.bf16.msra.mxu0 %v203
    %269 = vmatprep.subr.bf16.mxu0 %v206
    %270 = vmatpush1.bf16.msra.mxu0 %v205
    %271 = vmatprep.subr.bf16.mxu0 %v208
    %272 = vmatpush1.bf16.msra.mxu0 %v207
    %273 = vmatprep.subr.bf16.mxu0 %v210
    %274 = vmatpush1.bf16.msra.mxu0 %v209
    %275 = vmatprep.subr.bf16.mxu0 %v212
    %276 = vmatpush1.bf16.msra.mxu0 %v211
    %277 = vmatprep.subr.bf16.mxu0 %v214
    %278 = vmatpush1.bf16.msra.mxu0 %v213
    %279 = vmatprep.subr.bf16.mxu0 %v216
    %280 = vmatpush1.bf16.msra.mxu0 %v215
    %281 = vmatprep.subr.bf16.mxu0 %v218
    %282 = vmatpush1.bf16.msra.mxu0 %v217
    %283 = vmatprep.subr.bf16.mxu0 %v220
    %284 = vmatpush1.bf16.msra.mxu0 %v219
    %285 = vmatprep.mubr.bf16.mxu0 %v48
    %286 = vmatmul.mubr.bf16.gmra.mrb[0].mxu0 %v47
    %v287 = vpop.f32.mrb[0].mxu0
    %v288 = vadd.f32 %v86, %v287
    %v289 = vpop.f32.mrb[0].mxu0
    %v290 = vadd.f32 %v90, %v289
    %v291 = vpop.f32.mrb[0].mxu0
    %v292 = vadd.f32 %v86, %v291
    %v293 = vpop.f32.mrb[0].mxu0
    %v294 = vadd.f32 %v90, %v293
    %295 = vdwg.mxu0
    %v296 = vxor.u32 %v290, 2147483648
    %v297 = vxor.u32 %v294, 2147483648
    %v298 = vmul.f32 %v296, 1.442695
    %v299 = vpow.pop %v298
    %v300 = vmul.f32 %v297, 1.442695
    %v301 = vpow.pop %v300
    %v302 = vadd.f32 %v299, 1.0
    %v303 = vadd.f32 %v301, 1.0
    %v304 = vrcp.pop %v302
    %v305 = vmul.f32 1.0, %v304
    %v306 = vrcp.pop %v303
    %v307 = vmul.f32 1.0, %v306
    %v308 = vmul.f32 %v288, %v305
    %v309 = vmul.f32 %v292, %v307
    %310 = vst [vmem:[#allocation7] sm:$0xff] %v308
    %311 = vst [vmem:[#allocation7 + $0x8] sm:$0xff] %v309
    // Predicated region
    $region22: #{tpu_custom_call.1} parent=1 // pred_check
      _
    $region23: #{tpu_custom_call.1} parent=1 // pred_check_branch
      %313 = sbr.rel (0) target = $region25
    $region24: #{tpu_custom_call.1} parent=1 // pred_region
      %s315 = ssub.s32 256, 256
      %316 = vsyncadd [#allocation4], %s315
      %s317 = sshll.u32 [#allocation7], 4
      %s318 = int_to_ptr.vmem [resolvable:$true] %s317
      %323 = dma.vmem_to_hbm [thread:$0]  %s318, 256, %s3, [#allocation4], 128, 128, 8
    $region25: #{tpu_custom_call.1} parent=1 // pred_fallthru
      _
    // Predicated region
    $region26: #{tpu_custom_call.1} parent=1 // pred_check
      _
    $region27: #{tpu_custom_call.1} parent=1 // pred_check_branch
      %325 = sbr.rel (0) target = $region29
    $region28: #{tpu_custom_call.1} parent=1 // pred_region
      %326 = dma.done [#allocation4], 256
    $region29: #{tpu_custom_call.1} parent=1 // pred_fallthru
      _
    %327 = vsyncpa [#allocation3], 1
    %328 = vsyncpa [#allocation6], 1
    %329 = vsyncpa [#allocation4], 1

</llo_original>
